<compile_context>
chip_gen: v7x
topology: tpu7x:2x2x1
jax: 0.10.0
libtpu: 0.0.40
codegen_flags: <defaults>
</compile_context>

<pallas_src>
import functools

import jax
import jax.numpy as jnp
from jax.experimental import pallas as pl
from jax.experimental.pallas import tpu as pltpu


def _attention_kernel(step_bias_ref, bHp_ref, bH_ref,
                      wh2h_ref, bh2h_ref, wscore_ref,
                      wih_ctx_ref, whh_ref,
                      hid_ref,
                      h_sc, c_sc, *, score_bf16):
    """One grid point == one batch block; full decode recurrence runs in-kernel."""
    f32 = jnp.float32
    bf16 = jnp.bfloat16
    num_steps = hid_ref.shape[0]
    H = h_sc.shape[1]

    # fresh LSTM state for this batch block
    h_sc[...] = jnp.zeros_like(h_sc)
    c_sc[...] = jnp.zeros_like(c_sc)

    def step_body(s, carry):
        h = h_sc[...]                      # (Bt, H) f32
        c = c_sc[...]                      # (Bt, H) f32
        h_bf = h.astype(bf16)

        # --- AttentionCell: score + softmax + context ---
        h_proj = (jnp.dot(h_bf, wh2h_ref[...], preferred_element_type=f32)
                  + bh2h_ref[...])                                        # (Bt, H) f32
        if score_bf16:
            # v6e / v7x: bf16 EUP -> half the transcendental pushes, half the vreg traffic
            t = jnp.tanh(bHp_ref[...] + h_proj.astype(bf16)[:, None, :])  # (Bt, T, H) bf16
            e = jnp.sum((t * wscore_ref[...]).astype(f32), axis=-1)       # (Bt, T) f32
        else:
            # v5e: no bf16 VPU/EUP -> keep the elementwise score path in f32
            t = jnp.tanh(bHp_ref[...].astype(f32) + h_proj[:, None, :])   # (Bt, T, H) f32
            e = jnp.sum(t * wscore_ref[...].astype(f32), axis=-1)         # (Bt, T) f32

        # stable softmax over T (reciprocal instead of a VPU divide)
        e = e - jnp.max(e, axis=1, keepdims=True)
        p = jnp.exp(e)
        denom = jnp.sum(p, axis=1, keepdims=True)
        alpha = p * pl.reciprocal(denom, approx=False)                    # (Bt, T) f32
        # context = bmm(alpha^T, batch_H).squeeze(1); bf16 * f32 promotes to f32
        context = jnp.sum(alpha[:, :, None] * bH_ref[...], axis=1)        # (Bt, D) f32

        # --- LSTM cell on [context, char_onehot] (onehot + biases pre-folded) ---
        gates = (jnp.dot(context.astype(bf16), wih_ctx_ref[...],
                         preferred_element_type=f32)
                 + jnp.dot(h_bf, whh_ref[...], preferred_element_type=f32)
                 + step_bias_ref[s].astype(f32))                          # (Bt, 4H) f32
        i_g = jax.nn.sigmoid(gates[:, 0 * H:1 * H])
        f_g = jax.nn.sigmoid(gates[:, 1 * H:2 * H])
        g_g = jnp.tanh(gates[:, 2 * H:3 * H])
        o_g = jax.nn.sigmoid(gates[:, 3 * H:4 * H])
        c_new = f_g * c + i_g * g_g
        h_new = o_g * jnp.tanh(c_new)

        h_sc[...] = h_new
        c_sc[...] = c_new
        hid_ref[s] = h_new.astype(hid_ref.dtype)                          # generator is hoisted
        return carry

    jax.lax.fori_loop(0, num_steps, step_body, 0)


def attention_forward(batch_H, text, params, batch_max_length=25, block_b=None):
    B, T, D = batch_H.shape
    H = params["wh2h"].shape[0]
    C = params["wg"].shape[1]
    S = batch_max_length + 1
    f32, bf16 = jnp.float32, jnp.bfloat16

    # --- generation-aware knobs (robust: plain device_kind string) ---
    kind = ""
    try:
        kind = jax.devices()[0].device_kind.lower()
    except Exception:
        pass
    is_v7 = ("v7" in kind) or ("7x" in kind)
    is_v6 = "v6" in kind
    is_v5 = "v5" in kind
    score_bf16 = bool(is_v6 or is_v7)                     # bf16 EUP path on v6e/v7x only
    if is_v7:
        vmem_cap = 48 * 1024 * 1024                       # leave headroom on 64 MiB part
    elif is_v6 or is_v5:
        vmem_cap = 100 * 1024 * 1024                      # 128 MiB physical
    else:
        vmem_cap = 48 * 1024 * 1024                       # conservative default

    # --- wrapper-side (plain XLA) precomputation, hoisted out of the recurrence ---
    batch_H_f32 = batch_H.astype(f32)
    # step-invariant projection batch_H @ W_i2h
    bH_proj = jnp.dot(batch_H_f32, params["wi2h"], preferred_element_type=f32)     # (B, T, H)
    # one-hot @ W_ih is a row gather; pre-fold the LSTM bias
    tok = text[:, :S]
    step_bias = jnp.take(params["wih_oh"], tok, axis=0) + params["b_lstm"]          # (B, S, 4H)
    step_bias = jnp.transpose(step_bias, (1, 0, 2))                                  # (S, B, 4H)

    # bf16 storage for the big blocks + all MXU operands (f32 accumulation in-kernel)
    step_bias = step_bias.astype(bf16)
    bH_bf = batch_H_f32.astype(bf16)
    bHp_bf = bH_proj.astype(bf16)
    wh2h = params["wh2h"].astype(bf16)
    wih_ctx = params["wih_ctx"].astype(bf16)
    whh = params["whh"].astype(bf16)
    wscore = params["wscore"].reshape(1, H).astype(bf16)
    bh2h = params["bh2h"].reshape(1, H).astype(f32)

    # --- batch tiling: parallel grid axis (two blocks engage both v7x TensorCores) ---
    if block_b is None:
        block_b = B // 2 if (B >= 16 and B % 16 == 0) else B

    def vmem_estimate(bb):
        blocks = (S * bb * 4 * H * 2          # step_bias block (bf16)
                  + bb * T * H * 2            # bH_proj block (bf16)
                  + bb * T * D * 2            # batch_H block (bf16)
                  + (H * H + D * 4 * H + H * 4 * H) * 2   # gate weights (bf16)
                  + 2 * H * 4                 # bh2h + wscore (rounded up)
                  + S * bb * H * 4)           # hidden-state output block (f32)
        dbuf = 2 * blocks                     # double buffering across batch blocks
        scratch = 2 * bb * H * 4              # h, c state
        internal = 3 * bb * T * max(H, D) * 4  # per-step temporaries (t, products)
        return dbuf + scratch + internal

    while vmem_estimate(block_b) > vmem_cap and block_b % 16 == 0 and block_b > 8:
        block_b //= 2

    assert B % block_b == 0, "block_b must divide B"
    if block_b != B:
        assert block_b % 8 == 0, "batch tile must be a multiple of 8 sublanes"
    nb = B // block_b

    grid_spec = pltpu.PrefetchScalarGridSpec(
        num_scalar_prefetch=0,
        grid=(nb,),                                                   # batch blocks only
        in_specs=[
            pl.BlockSpec((S, block_b, 4 * H), lambda b: (0, b, 0)),   # step_bias (bf16)
            pl.BlockSpec((block_b, T, H), lambda b: (b, 0, 0)),       # bH_proj (bf16)
            pl.BlockSpec((block_b, T, D), lambda b: (b, 0, 0)),       # batch_H (bf16)
            pl.BlockSpec((H, H), lambda b: (0, 0)),                   # wh2h
            pl.BlockSpec((1, H), lambda b: (0, 0)),                   # bh2h (f32)
            pl.BlockSpec((1, H), lambda b: (0, 0)),                   # wscore
            pl.BlockSpec((D, 4 * H), lambda b: (0, 0)),               # LSTM W_ih (context cols)
            pl.BlockSpec((H, 4 * H), lambda b: (0, 0)),               # LSTM W_hh
        ],
        out_specs=pl.BlockSpec((S, block_b, H), lambda b: (0, b, 0)),  # per-step hidden states
        scratch_shapes=[pltpu.VMEM((block_b, H), jnp.float32),         # h state
                        pltpu.VMEM((block_b, H), jnp.float32)],        # c state
    )

    hid = pl.pallas_call(
        functools.partial(_attention_kernel, score_bf16=score_bf16),
        out_shape=jax.ShapeDtypeStruct((S, B, H), jnp.float32),
        grid_spec=grid_spec,
        compiler_params=pltpu.CompilerParams(
            dimension_semantics=("parallel",),
            vmem_limit_bytes=int(vmem_cap)),
    )(step_bias, bHp_bf, bH_bf, wh2h, bh2h, wscore, wih_ctx, whh)

    # generator hoisted out of the serial recurrence: one big MXU-friendly matmul
    hid_bsh = jnp.transpose(hid, (1, 0, 2))                            # (B, S, H)
    probs = jnp.dot(hid_bsh, params["wg"].astype(f32),
                    preferred_element_type=f32) + params["bg"]
    return probs


def init_params(key, input_size, hidden_size, num_classes):
    """Deterministic synthetic parameters (shapes match the torch module, transposed)."""
    ks = jax.random.split(key, 10)
    s = 0.1

    def u(k, shape):
        return jax.random.uniform(k, shape, jnp.float32, -s, s)

    return dict(
        wi2h=u(ks[0], (input_size, hidden_size)),            # i2h (no bias)
        wh2h=u(ks[1], (hidden_size, hidden_size)),            # h2h
        bh2h=u(ks[2], (hidden_size,)),
        wscore=u(ks[3], (hidden_size,)),                      # score (out=1, no bias)
        wih_ctx=u(ks[4], (input_size, 4 * hidden_size)),      # LSTM W_ih, context cols
        wih_oh=u(ks[5], (num_classes, 4 * hidden_size)),      # LSTM W_ih, onehot cols
        whh=u(ks[6], (hidden_size, 4 * hidden_size)),         # LSTM W_hh
        b_lstm=u(ks[7], (4 * hidden_size,)),                  # b_ih + b_hh combined
        wg=u(ks[8], (hidden_size, num_classes)),              # generator
        bg=u(ks[9], (num_classes,)),
    )


def ref_forward(batch_H, text, P, num_steps):
    """Pure-JAX f32 reference mirroring the PyTorch train-mode forward."""
    B = batch_H.shape[0]
    H = P["wh2h"].shape[0]
    C = P["wg"].shape[1]
    h = jnp.zeros((B, H), jnp.float32)
    c = jnp.zeros((B, H), jnp.float32)
    onehots = jax.nn.one_hot(text, C, dtype=jnp.float32)
    outs = []
    for i in range(num_steps):
        bH_proj = batch_H @ P["wi2h"]
        h_proj = h @ P["wh2h"] + P["bh2h"]
        t = jnp.tanh(bH_proj + h_proj[:, None, :])
        e = jnp.sum(t * P["wscore"][None, None, :], axis=-1)
        alpha = jax.nn.softmax(e, axis=1)
        context = jnp.sum(alpha[:, :, None] * batch_H, axis=1)
        gates = (context @ P["wih_ctx"] + onehots[:, i] @ P["wih_oh"]
                 + h @ P["whh"] + P["b_lstm"])
        i_g = jax.nn.sigmoid(gates[:, :H])
        f_g = jax.nn.sigmoid(gates[:, H:2 * H])
        g_g = jnp.tanh(gates[:, 2 * H:3 * H])
        o_g = jax.nn.sigmoid(gates[:, 3 * H:])
        c = f_g * c + i_g * g_g
        h = o_g * jnp.tanh(c)
        outs.append(h)
    out_h = jnp.stack(outs, axis=1)
    return out_h @ P["wg"] + P["bg"]


if __name__ == "__main__":
    # TODO(synk): inference-mode (is_train=False) greedy-decode branch is not implemented;
    # this covers the train-mode forward (teacher forcing), matching the reference.
    B, T, D, H, C = 2, 8, 32, 32, 38       # batch, encoder steps, input, hidden, classes
    batch_max_length = 7
    num_steps = batch_max_length + 1

    key = jax.random.PRNGKey(0)
    k1, k2, k3 = jax.random.split(key, 3)
    batch_H = jax.random.normal(k1, (B, T, D), jnp.float32)
    text = jax.random.randint(k2, (B, num_steps), 0, C, jnp.int32)  # text[:,0] = [GO]-ish
    params = init_params(k3, D, H, C)

    probs = attention_forward(batch_H, text, params, batch_max_length=batch_max_length)
    probs = jax.block_until_ready(probs)

    assert probs.shape == (B, num_steps, C)
    ref = ref_forward(batch_H, text, params, num_steps)
    max_err = float(jnp.max(jnp.abs(probs - ref)))
    # bf16 storage / bf16 MXU operands -> relaxed tolerance vs the f32 reference
    assert jnp.allclose(probs, ref, atol=2e-2, rtol=2e-2), max_err

    print("KERNEL_OK")
</pallas_src>

<mosaic_0001>
module attributes {stable_mosaic.version = 11 : i64} {
  func.func @_attention_kernel(%arg0: i32, %arg1: memref<8x2x128xbf16, #tpu.memory_space<vmem>>, %arg2: memref<2x8x32xbf16, #tpu.memory_space<vmem>>, %arg3: memref<2x8x32xbf16, #tpu.memory_space<vmem>>, %arg4: memref<32x32xbf16, #tpu.memory_space<vmem>>, %arg5: memref<1x32xf32, #tpu.memory_space<vmem>>, %arg6: memref<1x32xbf16, #tpu.memory_space<vmem>>, %arg7: memref<32x128xbf16, #tpu.memory_space<vmem>>, %arg8: memref<32x128xbf16, #tpu.memory_space<vmem>>, %arg9: memref<8x2x32xf32, #tpu.memory_space<vmem>>, %arg10: memref<2x32xf32, #tpu.memory_space<vmem>>, %arg11: memref<2x32xf32, #tpu.memory_space<vmem>>) attributes {dimension_semantics = [#tpu.dimension_semantics<parallel>], iteration_bounds = array<i64: 1>, scalar_prefetch = 0 : i64, scratch_operands = 2 : i64, tpu.core_type = #tpu.core_type<tc>, window_params = [{transform_indices = @transform_0, window_bounds = array<i64: 8, 2, 128>}, {transform_indices = @transform_1, window_bounds = array<i64: 2, 8, 32>}, {transform_indices = @transform_2, window_bounds = array<i64: 2, 8, 32>}, {pipeline_mode = #tpu.pipeline_mode<synchronous>, transform_indices = @transform_3, window_bounds = array<i64: 32, 32>}, {pipeline_mode = #tpu.pipeline_mode<synchronous>, transform_indices = @transform_4, window_bounds = array<i64: 1, 32>}, {pipeline_mode = #tpu.pipeline_mode<synchronous>, transform_indices = @transform_5, window_bounds = array<i64: 1, 32>}, {pipeline_mode = #tpu.pipeline_mode<synchronous>, transform_indices = @transform_6, window_bounds = array<i64: 32, 128>}, {pipeline_mode = #tpu.pipeline_mode<synchronous>, transform_indices = @transform_7, window_bounds = array<i64: 32, 128>}, {transform_indices = @transform_8, window_bounds = array<i64: 8, 2, 32>}]} {
    %cst = arith.constant 0.000000e+00 : f32
    %0 = vector.broadcast %cst : f32 to vector<2x32xf32>
    %c0 = arith.constant 0 : index
    %c0_0 = arith.constant 0 : index
    %1 = vector.load %arg10[%c0, %c0_0] : memref<2x32xf32, #tpu.memory_space<vmem>>, vector<2x32xf32>
    tpu.vector_store %arg10[%c0, %c0_0], %0 {strides = array<i32>} : memref<2x32xf32, #tpu.memory_space<vmem>>, vector<2x32xf32>,
    %cst_1 = arith.constant 0.000000e+00 : f32
    %2 = vector.broadcast %cst_1 : f32 to vector<2x32xf32>
    %c0_2 = arith.constant 0 : index
    %c0_3 = arith.constant 0 : index
    %3 = vector.load %arg11[%c0_2, %c0_3] : memref<2x32xf32, #tpu.memory_space<vmem>>, vector<2x32xf32>
    tpu.vector_store %arg11[%c0_2, %c0_3], %2 {strides = array<i32>} : memref<2x32xf32, #tpu.memory_space<vmem>>, vector<2x32xf32>,
    %c0_i32 = arith.constant 0 : i32
    %c8_i32 = arith.constant 8 : i32
    %4 = arith.addi %c0_i32, %c8_i32 : i32
    %c1_i32 = arith.constant 1 : i32
    scf.for %arg12 = %c0_i32 to %4 step %c1_i32  : i32 {
      %c0_5 = arith.constant 0 : index
      %c0_6 = arith.constant 0 : index
      %5 = vector.load %arg10[%c0_5, %c0_6] : memref<2x32xf32, #tpu.memory_space<vmem>>, vector<2x32xf32>
      %c0_7 = arith.constant 0 : index
      %c0_8 = arith.constant 0 : index
      %6 = vector.load %arg11[%c0_7, %c0_8] : memref<2x32xf32, #tpu.memory_space<vmem>>, vector<2x32xf32>
      %7 = arith.truncf %5 : vector<2x32xf32> to vector<2x32xbf16>
      %c0_9 = arith.constant 0 : index
      %c0_10 = arith.constant 0 : index
      %8 = vector.load %arg4[%c0_9, %c0_10] : memref<32x32xbf16, #tpu.memory_space<vmem>>, vector<32x32xbf16>
      %cst_11 = arith.constant dense<0.000000e+00> : vector<2x32xf32>
      %9 = tpu.matmul %7, %8, %cst_11 {dimension_numbers = #tpu.dot_dimension_numbers<[1], [0], [0], [1], [0, 0, 1, 1], [], []>} : vector<2x32xbf16>, vector<32x32xbf16>, vector<2x32xf32> -> vector<2x32xf32>
      %c0_12 = arith.constant 0 : index
      %c0_13 = arith.constant 0 : index
      %10 = vector.load %arg5[%c0_12, %c0_13] : memref<1x32xf32, #tpu.memory_space<vmem>>, vector<1x32xf32>
      %11 = vector.broadcast %10 : vector<1x32xf32> to vector<2x32xf32>
      %12 = arith.addf %9, %11 : vector<2x32xf32>
      %c0_14 = arith.constant 0 : index
      %c0_15 = arith.constant 0 : index
      %c0_16 = arith.constant 0 : index
      %13 = vector.load %arg2[%c0_14, %c0_15, %c0_16] : memref<2x8x32xbf16, #tpu.memory_space<vmem>>, vector<2x8x32xbf16>
      %14 = arith.extf %13 : vector<2x8x32xbf16> to vector<2x8x32xf32>
      %15 = vector.shape_cast %12 : vector<2x32xf32> to vector<2x1x32xf32>
      %16 = vector.broadcast %15 : vector<2x1x32xf32> to vector<2x8x32xf32>
      %17 = arith.addf %14, %16 : vector<2x8x32xf32>
      %18 = math.tanh %17 : vector<2x8x32xf32>
      %c0_17 = arith.constant 0 : index
      %c0_18 = arith.constant 0 : index
      %19 = vector.load %arg6[%c0_17, %c0_18] : memref<1x32xbf16, #tpu.memory_space<vmem>>, vector<1x32xbf16>
      %20 = arith.extf %19 : vector<1x32xbf16> to vector<1x32xf32>
      %21 = vector.shape_cast %20 : vector<1x32xf32> to vector<1x1x32xf32>
      %22 = vector.broadcast %21 : vector<1x1x32xf32> to vector<2x8x32xf32>
      %23 = arith.mulf %18, %22 : vector<2x8x32xf32>
      %cst_19 = arith.constant dense<0.000000e+00> : vector<2x8xf32>
      %24 = vector.multi_reduction <add>, %23, %cst_19 [2] : vector<2x8x32xf32> to vector<2x8xf32>
      %cst_20 = arith.constant dense<0xFF800000> : vector<2xf32>
      %25 = vector.multi_reduction <maximumf>, %24, %cst_20 [1] : vector<2x8xf32> to vector<2xf32>
      %26 = vector.shape_cast %25 : vector<2xf32> to vector<2x1xf32>
      %27 = vector.broadcast %26 : vector<2x1xf32> to vector<2x8xf32>
      %28 = arith.subf %24, %27 : vector<2x8xf32>
      %29 = math.exp %28 : vector<2x8xf32>
      %cst_21 = arith.constant dense<0.000000e+00> : vector<2xf32>
      %30 = vector.multi_reduction <add>, %29, %cst_21 [1] : vector<2x8xf32> to vector<2xf32>
      %31 = vector.shape_cast %30 : vector<2xf32> to vector<2x1xf32>
      %32 = tpu.reciprocal %31 : vector<2x1xf32> -> vector<2x1xf32>
      %33 = vector.broadcast %32 : vector<2x1xf32> to vector<2x8xf32>
      %34 = arith.mulf %29, %33 : vector<2x8xf32>
      %35 = vector.shape_cast %34 : vector<2x8xf32> to vector<2x8x1xf32>
      %c0_22 = arith.constant 0 : index
      %c0_23 = arith.constant 0 : index
      %c0_24 = arith.constant 0 : index
      %36 = vector.load %arg3[%c0_22, %c0_23, %c0_24] : memref<2x8x32xbf16, #tpu.memory_space<vmem>>, vector<2x8x32xbf16>
      %37 = arith.extf %36 : vector<2x8x32xbf16> to vector<2x8x32xf32>
      %38 = vector.broadcast %35 : vector<2x8x1xf32> to vector<2x8x32xf32>
      %39 = arith.mulf %38, %37 : vector<2x8x32xf32>
      %cst_25 = arith.constant dense<0.000000e+00> : vector<2x32xf32>
      %40 = vector.multi_reduction <add>, %39, %cst_25 [1] : vector<2x8x32xf32> to vector<2x32xf32>
      %41 = arith.truncf %40 : vector<2x32xf32> to vector<2x32xbf16>
      %c0_26 = arith.constant 0 : index
      %c0_27 = arith.constant 0 : index
      %42 = vector.load %arg7[%c0_26, %c0_27] : memref<32x128xbf16, #tpu.memory_space<vmem>>, vector<32x128xbf16>
      %cst_28 = arith.constant dense<0.000000e+00> : vector<2x128xf32>
      %43 = tpu.matmul %41, %42, %cst_28 {dimension_numbers = #tpu.dot_dimension_numbers<[1], [0], [0], [1], [0, 0, 1, 1], [], []>} : vector<2x32xbf16>, vector<32x128xbf16>, vector<2x128xf32> -> vector<2x128xf32>
      %c0_29 = arith.constant 0 : index
      %c0_30 = arith.constant 0 : index
      %44 = vector.load %arg8[%c0_29, %c0_30] : memref<32x128xbf16, #tpu.memory_space<vmem>>, vector<32x128xbf16>
      %cst_31 = arith.constant dense<0.000000e+00> : vector<2x128xf32>
      %45 = tpu.matmul %7, %44, %cst_31 {dimension_numbers = #tpu.dot_dimension_numbers<[1], [0], [0], [1], [0, 0, 1, 1], [], []>} : vector<2x32xbf16>, vector<32x128xbf16>, vector<2x128xf32> -> vector<2x128xf32>
      %46 = arith.addf %43, %45 : vector<2x128xf32>
      %47 = arith.index_cast %arg12 : i32 to index
      %c0_32 = arith.constant 0 : index
      %c0_33 = arith.constant 0 : index
      %48 = vector.load %arg1[%47, %c0_32, %c0_33] : memref<8x2x128xbf16, #tpu.memory_space<vmem>>, vector<1x2x128xbf16>
      %49 = vector.shape_cast %48 : vector<1x2x128xbf16> to vector<2x128xbf16>
      %50 = arith.extf %49 : vector<2x128xbf16> to vector<2x128xf32>
      %51 = arith.addf %46, %50 : vector<2x128xf32>
      %52 = vector.extract_strided_slice %51 {offsets = [0, 0], sizes = [2, 32], strides = [1, 1]} : vector<2x128xf32> to vector<2x32xf32>
      %53 = arith.negf %52 : vector<2x32xf32>
      %54 = math.exp %53 : vector<2x32xf32>
      %cst_34 = arith.constant 1.000000e+00 : f32
      %55 = vector.broadcast %cst_34 : f32 to vector<2x32xf32>
      %56 = arith.addf %55, %54 : vector<2x32xf32>
      %57 = arith.divf %55, %56 : vector<2x32xf32>
      %58 = vector.extract_strided_slice %51 {offsets = [0, 32], sizes = [2, 32], strides = [1, 1]} : vector<2x128xf32> to vector<2x32xf32>
      %59 = arith.negf %58 : vector<2x32xf32>
      %60 = math.exp %59 : vector<2x32xf32>
      %cst_35 = arith.constant 1.000000e+00 : f32
      %61 = vector.broadcast %cst_35 : f32 to vector<2x32xf32>
      %62 = arith.addf %61, %60 : vector<2x32xf32>
      %63 = arith.divf %61, %62 : vector<2x32xf32>
      %64 = vector.extract_strided_slice %51 {offsets = [0, 64], sizes = [2, 32], strides = [1, 1]} : vector<2x128xf32> to vector<2x32xf32>
      %65 = math.tanh %64 : vector<2x32xf32>
      %66 = vector.extract_strided_slice %51 {offsets = [0, 96], sizes = [2, 32], strides = [1, 1]} : vector<2x128xf32> to vector<2x32xf32>
      %67 = arith.negf %66 : vector<2x32xf32>
      %68 = math.exp %67 : vector<2x32xf32>
      %cst_36 = arith.constant 1.000000e+00 : f32
      %69 = vector.broadcast %cst_36 : f32 to vector<2x32xf32>
      %70 = arith.addf %69, %68 : vector<2x32xf32>
      %71 = arith.divf %69, %70 : vector<2x32xf32>
      %72 = arith.mulf %63, %6 : vector<2x32xf32>
      %73 = arith.mulf %57, %65 : vector<2x32xf32>
      %74 = arith.addf %72, %73 : vector<2x32xf32>
      %75 = math.tanh %74 : vector<2x32xf32>
      %76 = arith.mulf %71, %75 : vector<2x32xf32>
      %c0_37 = arith.constant 0 : index
      %c0_38 = arith.constant 0 : index
      %77 = vector.load %arg10[%c0_37, %c0_38] : memref<2x32xf32, #tpu.memory_space<vmem>>, vector<2x32xf32>
      tpu.vector_store %arg10[%c0_37, %c0_38], %76 {strides = array<i32>} : memref<2x32xf32, #tpu.memory_space<vmem>>, vector<2x32xf32>,
      %c0_39 = arith.constant 0 : index
      %c0_40 = arith.constant 0 : index
      %78 = vector.load %arg11[%c0_39, %c0_40] : memref<2x32xf32, #tpu.memory_space<vmem>>, vector<2x32xf32>
      tpu.vector_store %arg11[%c0_39, %c0_40], %74 {strides = array<i32>} : memref<2x32xf32, #tpu.memory_space<vmem>>, vector<2x32xf32>,
      %79 = arith.index_cast %arg12 : i32 to index
      %c0_41 = arith.constant 0 : index
      %c0_42 = arith.constant 0 : index
      %80 = vector.load %arg9[%79, %c0_41, %c0_42] : memref<8x2x32xf32, #tpu.memory_space<vmem>>, vector<1x2x32xf32>
      %81 = vector.shape_cast %80 : vector<1x2x32xf32> to vector<2x32xf32>
      %82 = vector.shape_cast %76 : vector<2x32xf32> to vector<1x2x32xf32>
      tpu.vector_store %arg9[%79, %c0_41, %c0_42], %82 {strides = array<i32>} : memref<8x2x32xf32, #tpu.memory_space<vmem>>, vector<1x2x32xf32>,
    }
    %c8_i32_4 = arith.constant 8 : i32
    return
  }
  func.func @transform_0(%arg0: i32) -> (i32, i32, i32) {
    %c0_i32 = arith.constant 0 : i32
    %c0_i32_0 = arith.constant 0 : i32
    %c0_i32_1 = arith.constant 0 : i32
    return %c0_i32, %arg0, %c0_i32_0 : i32, i32, i32
  }
  func.func @transform_1(%arg0: i32) -> (i32, i32, i32) {
    %c0_i32 = arith.constant 0 : i32
    %c0_i32_0 = arith.constant 0 : i32
    %c0_i32_1 = arith.constant 0 : i32
    return %arg0, %c0_i32, %c0_i32_0 : i32, i32, i32
  }
  func.func @transform_2(%arg0: i32) -> (i32, i32, i32) {
    %c0_i32 = arith.constant 0 : i32
    %c0_i32_0 = arith.constant 0 : i32
    %c0_i32_1 = arith.constant 0 : i32
    return %arg0, %c0_i32, %c0_i32_0 : i32, i32, i32
  }
  func.func @transform_3(%arg0: i32) -> (i32, i32) {
    %c0_i32 = arith.constant 0 : i32
    %c0_i32_0 = arith.constant 0 : i32
    %c0_i32_1 = arith.constant 0 : i32
    return %c0_i32, %c0_i32_0 : i32, i32
  }
  func.func @transform_4(%arg0: i32) -> (i32, i32) {
    %c0_i32 = arith.constant 0 : i32
    %c0_i32_0 = arith.constant 0 : i32
    %c0_i32_1 = arith.constant 0 : i32
    return %c0_i32, %c0_i32_0 : i32, i32
  }
  func.func @transform_5(%arg0: i32) -> (i32, i32) {
    %c0_i32 = arith.constant 0 : i32
    %c0_i32_0 = arith.constant 0 : i32
    %c0_i32_1 = arith.constant 0 : i32
    return %c0_i32, %c0_i32_0 : i32, i32
  }
  func.func @transform_6(%arg0: i32) -> (i32, i32) {
    %c0_i32 = arith.constant 0 : i32
    %c0_i32_0 = arith.constant 0 : i32
    %c0_i32_1 = arith.constant 0 : i32
    return %c0_i32, %c0_i32_0 : i32, i32
  }
  func.func @transform_7(%arg0: i32) -> (i32, i32) {
    %c0_i32 = arith.constant 0 : i32
    %c0_i32_0 = arith.constant 0 : i32
    %c0_i32_1 = arith.constant 0 : i32
    return %c0_i32, %c0_i32_0 : i32, i32
  }
  func.func @transform_8(%arg0: i32) -> (i32, i32, i32) {
    %c0_i32 = arith.constant 0 : i32
    %c0_i32_0 = arith.constant 0 : i32
    %c0_i32_1 = arith.constant 0 : i32
    return %c0_i32, %arg0, %c0_i32_0 : i32, i32, i32
  }
}

</mosaic_0001>

<llo_original>
// kernel: tpu_custom_call.1
$region0: #{tpu_custom_call.1}
  #allocation0 [shape = 'u32[]', space=smem, size = 0x4, offset = 0x4, fixed_abs, tag = 'smem constant byte address 0x4 - core index']
  #allocation1 [shape = 'u32[144,128]{1,0:T(1,128)}', space=vmem, size = 0x12000, scoped, tag = 'internal scratch']
  #allocation2 [shape = 'f32[2,32]{1,0:T(2,128)}', space=vmem, size = 0x400, scoped, tag = 'scratch operand']
  #allocation3 [shape = 'f32[2,32]{1,0:T(2,128)}', space=vmem, size = 0x400, scoped, tag = 'scratch operand']
  %s0 = inlined_call_operand.hbm [shape: bf16[8,2,128], index: 0, kind: input, shape index: {}]
  %s1 = inlined_call_operand.hbm [shape: bf16[2,8,32], index: 1, kind: input, shape index: {}]
  %s2 = inlined_call_operand.hbm [shape: bf16[2,8,32], index: 2, kind: input, shape index: {}]
  %s3 = inlined_call_operand.hbm [shape: bf16[32,32], index: 3, kind: input, shape index: {}]
  %s4 = inlined_call_operand.vmem [shape: f32[1,32], index: 4, kind: input, shape index: {}]
  %s5 = inlined_call_operand.vmem [shape: bf16[1,32], index: 5, kind: input, shape index: {}]
  %s6 = inlined_call_operand.vmem [shape: bf16[32,128], index: 6, kind: input, shape index: {}]
  %s7 = inlined_call_operand.hbm [shape: bf16[32,128], index: 7, kind: input, shape index: {}]
  %s8 = inlined_call_operand.hbm [shape: f32[8,2,32], index: 8, kind: output, shape index: {}]
  %s9 = sld [smem:[#allocation0]]
  $region69: #{tpu_custom_call.1} parent=0
    _
  %s11 = ssub.s32 1, %s9
  %s12 = scalar_select 0, %s11, %s9
  $region1: #{tpu_custom_call.1} parent=0
    #allocation4 [shape = 'u8[4096]{0}', space=vmem, size = 0x1000, scoped, tag = 'input window, operand 0, single buffered']
    #allocation5 [shape = 's32[1]{0}', space=sflag, size = 0x4, scoped, tag = 'scoped memory for tpu_custom_call.1']
    #allocation6 [shape = 's32[1]{0}', space=sflag, size = 0x4, scoped, tag = 'scoped memory for tpu_custom_call.1']
    #allocation7 [shape = 'u8[4096]{0}', space=vmem, size = 0x1000, scoped, tag = 'input window, operand 1, single buffered']
    #allocation8 [shape = 's32[1]{0}', space=sflag, size = 0x4, scoped, tag = 'scoped memory for tpu_custom_call.1']
    #allocation9 [shape = 'u8[4096]{0}', space=vmem, size = 0x1000, scoped, tag = 'input window, operand 2, single buffered']
    #allocation10 [shape = 'u8[8192]{0}', space=vmem, size = 0x2000, scoped, tag = 'input window, operand 3, single buffered']
    #allocation11 [shape = 's32[1]{0}', space=sflag, size = 0x4, scoped, tag = 'scoped memory for tpu_custom_call.1']
    #allocation12 [shape = 'u8[8192]{0}', space=vmem, size = 0x2000, scoped, tag = 'input window, operand 7, single buffered']
    #allocation13 [shape = 'u8[8192]{0}', space=vmem, size = 0x2000, scoped, tag = 'output window, operand 0, single buffered']
    %13 = vsyncpa [#allocation5], 0
    %14 = vsyncpa [#allocation8], 0
    %15 = vsyncpa [#allocation11], 0
    %16 = vsyncpa [#allocation6], 0
    // Predicated region
    $region2: #{tpu_custom_call.1} parent=1 // pred_check
      _
    $region3: #{tpu_custom_call.1} parent=1 // pred_check_branch
      %18 = sbr.rel (0) target = $region5
    $region4: #{tpu_custom_call.1} parent=1 // pred_region
      %s20 = ssub.s32 128, 128
      %21 = vsyncadd [#allocation5], %s20
      %s22 = sshll.u32 [#allocation4], 4
      %s23 = int_to_ptr.vmem [resolvable:$true] %s22
      %28 = dma.hbm_to_vmem [thread:$0]  %s0, 128, %s23, [#allocation5], 16, 16, 1
    $region5: #{tpu_custom_call.1} parent=1 // pred_fallthru
      _
    // Predicated region
    $region6: #{tpu_custom_call.1} parent=1 // pred_check
      _
    $region7: #{tpu_custom_call.1} parent=1 // pred_check_branch
      %30 = sbr.rel (0) target = $region9
    $region8: #{tpu_custom_call.1} parent=1 // pred_region
      %s32 = ssub.s32 128, 128
      %33 = vsyncadd [#allocation8], %s32
      %s34 = sshll.u32 [#allocation7], 4
      %s35 = int_to_ptr.vmem [resolvable:$true] %s34
      %40 = dma.hbm_to_vmem [thread:$0]  %s1, 128, %s35, [#allocation8], 64, 64, 4
    $region9: #{tpu_custom_call.1} parent=1 // pred_fallthru
      _
    // Predicated region
    $region10: #{tpu_custom_call.1} parent=1 // pred_check
      _
    $region11: #{tpu_custom_call.1} parent=1 // pred_check_branch
      %42 = sbr.rel (0) target = $region13
    $region12: #{tpu_custom_call.1} parent=1 // pred_region
      %s44 = ssub.s32 128, 128
      %45 = vsyncadd [#allocation8], %s44
      %s46 = sshll.u32 [#allocation9], 4
      %s47 = int_to_ptr.vmem [resolvable:$true] %s46
      %52 = dma.hbm_to_vmem [thread:$0]  %s2, 128, %s47, [#allocation8], 64, 64, 4
    $region13: #{tpu_custom_call.1} parent=1 // pred_fallthru
      _
    // Predicated region
    $region14: #{tpu_custom_call.1} parent=1 // pred_check
      _
    $region15: #{tpu_custom_call.1} parent=1 // pred_check_branch
      %54 = sbr.rel (0) target = $region17
    $region16: #{tpu_custom_call.1} parent=1 // pred_region
      %s56 = ssub.s32 256, 256
      %57 = vsyncadd [#allocation11], %s56
      %s58 = sshll.u32 [#allocation10], 4
      %s59 = int_to_ptr.vmem [resolvable:$true] %s58
      %64 = dma.hbm_to_vmem [thread:$0]  %s3, 256, %s59, [#allocation11], 64, 64, 4
    $region17: #{tpu_custom_call.1} parent=1 // pred_fallthru
      _
    // Predicated region
    $region18: #{tpu_custom_call.1} parent=1 // pred_check
      _
    $region19: #{tpu_custom_call.1} parent=1 // pred_check_branch
      %66 = sbr.rel (0) target = $region21
    $region20: #{tpu_custom_call.1} parent=1 // pred_region
      _
    $region21: #{tpu_custom_call.1} parent=1 // pred_fallthru
      _
    // Predicated region
    $region22: #{tpu_custom_call.1} parent=1 // pred_check
      _
    $region23: #{tpu_custom_call.1} parent=1 // pred_check_branch
      %68 = sbr.rel (0) target = $region25
    $region24: #{tpu_custom_call.1} parent=1 // pred_region
      _
    $region25: #{tpu_custom_call.1} parent=1 // pred_fallthru
      _
    // Predicated region
    $region26: #{tpu_custom_call.1} parent=1 // pred_check
      _
    $region27: #{tpu_custom_call.1} parent=1 // pred_check_branch
      %70 = sbr.rel (0) target = $region29
    $region28: #{tpu_custom_call.1} parent=1 // pred_region
      _
    $region29: #{tpu_custom_call.1} parent=1 // pred_fallthru
      _
    // Predicated region
    $region30: #{tpu_custom_call.1} parent=1 // pred_check
      _
    $region31: #{tpu_custom_call.1} parent=1 // pred_check_branch
      %72 = sbr.rel (0) target = $region33
    $region32: #{tpu_custom_call.1} parent=1 // pred_region
      %s74 = ssub.s32 256, 256
      %75 = vsyncadd [#allocation11], %s74
      %s76 = sshll.u32 [#allocation12], 4
      %s77 = int_to_ptr.vmem [resolvable:$true] %s76
      %82 = dma.hbm_to_vmem [thread:$0]  %s7, 256, %s77, [#allocation11], 64, 64, 4
    $region33: #{tpu_custom_call.1} parent=1 // pred_fallthru
      _
    // Predicated region
    $region34: #{tpu_custom_call.1} parent=1 // pred_check
      _
    $region35: #{tpu_custom_call.1} parent=1 // pred_check_branch
      %84 = sbr.rel (0) target = $region37
    $region36: #{tpu_custom_call.1} parent=1 // pred_region
      %85 = dma.done [#allocation5], 128
    $region37: #{tpu_custom_call.1} parent=1 // pred_fallthru
      _
    // Predicated region
    $region38: #{tpu_custom_call.1} parent=1 // pred_check
      _
    $region39: #{tpu_custom_call.1} parent=1 // pred_check_branch
      %87 = sbr.rel (0) target = $region41
    $region40: #{tpu_custom_call.1} parent=1 // pred_region
      %88 = dma.done [#allocation8], 128
    $region41: #{tpu_custom_call.1} parent=1 // pred_fallthru
      _
    // Predicated region
    $region42: #{tpu_custom_call.1} parent=1 // pred_check
      _
    $region43: #{tpu_custom_call.1} parent=1 // pred_check_branch
      %90 = sbr.rel (0) target = $region45
    $region44: #{tpu_custom_call.1} parent=1 // pred_region
      %91 = dma.done [#allocation8], 128
    $region45: #{tpu_custom_call.1} parent=1 // pred_fallthru
      _
    // Predicated region
    $region46: #{tpu_custom_call.1} parent=1 // pred_check
      _
    $region47: #{tpu_custom_call.1} parent=1 // pred_check_branch
      %93 = sbr.rel (0) target = $region49
    $region48: #{tpu_custom_call.1} parent=1 // pred_region
      %94 = dma.done [#allocation11], 256
    $region49: #{tpu_custom_call.1} parent=1 // pred_fallthru
      _
    // Predicated region
    $region50: #{tpu_custom_call.1} parent=1 // pred_check
      _
    $region51: #{tpu_custom_call.1} parent=1 // pred_check_branch
      %96 = sbr.rel (0) target = $region53
    $region52: #{tpu_custom_call.1} parent=1 // pred_region
      %97 = dma.done [#allocation11], 256
    $region53: #{tpu_custom_call.1} parent=1 // pred_fallthru
      _
    %vm99 = vcmask 254976
    %100 = vst.msk [vmem:[#allocation2] sm:$0x3] %vm99, 0.0
    %101 = vst.msk [vmem:[#allocation3] sm:$0x3] %vm99, 0.0
    loop: start=0, step=1, limit=8
    $region54: #{tpu_custom_call.1} parent=1 // loop_pre_header
      _
    $region55: #{tpu_custom_call.1} parent=1 // loop_header
      %s103 = sphi 0, %s107
      %p104 = scmp.ge.s32.totalorder %s103, 8
    $region56: #{tpu_custom_call.1} parent=1 // loop_header_branch
      %106 = sbr.rel (%p104) target = $region60
    $region57: #{tpu_custom_call.1} parent=1 // loop_body
      %v108 = vld [vmem:[#allocation2] sm:$0x3]
      %v109 = vld [vmem:[#allocation3] sm:$0x3]
      %v110 = vpack.c.bf16 %v108, %v108
      %v111 = vld [vmem:[#allocation10] sm:$0xf]
      %v112 = vld [vmem:[#allocation10 + $0x4] sm:$0xf]
      %v113 = vld [vmem:[#allocation10 + $0x8] sm:$0xf]
      %v114 = vld [vmem:[#allocation10 + $0xc] sm:$0xf]
      %v115 = vld [vmem:[%s4] sm:$0x1]
      %v117 = vlaneseq
      %v118 = vshrl.u32 %v117, 7
      %v119 = vsub.s32 0, %v118
      %v120 = vrot.slane %v115, %v119
      %v126 = vunpack.c.l.b16 %v111
      %v127 = vunpack.c.l.b16 %v112
      %v128 = vunpack.c.l.b16 %v113
      %v129 = vunpack.c.l.b16 %v114
      %v130 = vpack.c.b16 %v127, %v126
      %v131 = vpack.c.b16 %v129, %v128
      %vm134 = vcmask 261120
      %v136 = vsel %vm134, %v110, 0
      %138 = vmatprep.subr.bf16.mxu0 0
      %139 = vmatpush1.bf16.msra.mxu0 %v130
      %140 = vmatprep.subr.bf16.mxu0 0
      %141 = vmatpush1.bf16.msra.mxu0 %v131
      %142 = vmatprep.subr.bf16.mxu0 0
      %143 = vmatpush1.bf16.msra.mxu0 0
      %144 = vmatprep.subr.bf16.mxu0 0
      %145 = vmatpush1.bf16.msra.mxu0 0
      %146 = vmatprep.subr.bf16.mxu0 0
      %147 = vmatpush1.bf16.msra.mxu0 0
      %148 = vmatprep.subr.bf16.mxu0 0
      %149 = vmatpush1.bf16.msra.mxu0 0
      %150 = vmatprep.subr.bf16.mxu0 0
      %151 = vmatpush1.bf16.msra.mxu0 0
      %152 = vmatprep.subr.bf16.mxu0 0
      %153 = vmatpush1.bf16.msra.mxu0 0
      %154 = vmatprep.subr.bf16.mxu0 0
      %155 = vmatpush1.bf16.msra.mxu0 0
      %156 = vmatprep.subr.bf16.mxu0 0
      %157 = vmatpush1.bf16.msra.mxu0 0
      %158 = vmatprep.subr.bf16.mxu0 0
      %159 = vmatpush1.bf16.msra.mxu0 0
      %160 = vmatprep.subr.bf16.mxu0 0
      %161 = vmatpush1.bf16.msra.mxu0 0
      %162 = vmatprep.subr.bf16.mxu0 0
      %163 = vmatpush1.bf16.msra.mxu0 0
      %164 = vmatprep.subr.bf16.mxu0 0
      %165 = vmatpush1.bf16.msra.mxu0 0
      %166 = vmatprep.subr.bf16.mxu0 0
      %167 = vmatpush1.bf16.msra.mxu0 0
      %168 = vmatprep.subr.bf16.mxu0 0
      %169 = vmatpush1.bf16.msra.mxu0 0
      %170 = vmatprep.mubr.bf16.mxu0 0
      %171 = vmatmul.mubr.bf16.gmra.mrb[0].mxu0 %v136
      %v172 = vpop.f32.mrb[0].mxu0
      %v173 = vadd.f32 %v120, %v172
      %v174 = vpop.f32.mrb[0].mxu0
      %v175 = vpop.f32.mrb[0].mxu0
      %v176 = vpop.f32.mrb[0].mxu0
      %177 = vdwg.mxu0
      %v178 = vld [vmem:[#allocation7] sm:$0xf]
      %v179 = vld [vmem:[#allocation7 + $0x4] sm:$0xf]
      %v180 = vunpack.c.l.bf16 %v178
      %v181 = vunpack.c.l.bf16 %v179
      %v184 = vunpack.c.l.s4 1966171168
      %v185 = vunpack.c.0.s8 %v184
      %v186 = vlaneseq
      %v187 = vshrl.u32 %v186, 7
      %v188 = vsub.s32 %v185, %v187
      %v189 = vrot.slane %v173, %v188
      %v190 = vcombine.high %v189, %v189
      %v192 = vunpack.c.l.s4 1966171168
      %v193 = vunpack.c.0.s8 %v192
      %v194 = vlaneseq
      %v195 = vshrl.u32 %v194, 7
      %v196 = vsub.s32 %v193, %v195
      %v197 = vrot.slane %v189, %v196
      %v199 = vunpack.c.l.s4 1966171168
      %v200 = vunpack.c.0.s8 %v199
      %v201 = vlaneseq
      %v202 = vshrl.u32 %v201, 7
      %v203 = vsub.s32 %v200, %v202
      %v204 = vrot.slane %v190, %v203
      %v205 = vlaneseq
      %v206 = vshrl.u32 %v205, 7
      %v207 = vsub.s32 0, %v206
      %v208 = vrot.slane %v197, %v207
      %v209 = vlaneseq
      %v210 = vshrl.u32 %v209, 7
      %v211 = vsub.s32 0, %v210
      %v212 = vrot.slane %v204, %v211
      %v215 = vadd.f32 %v180, %v208
      %v216 = vadd.f32 %v181, %v212
      %v217 = vtanh.pop %v215
      %v218 = vtanh.pop %v216
      %v219 = vld [vmem:[%s5] sm:$0x1]
      %v220 = vunpack.c.l.bf16 %v219
      %v221 = vlaneseq
      %v222 = vshrl.u32 %v221, 7
      %v223 = vsub.s32 0, %v222
      %v224 = vrot.slane %v220, %v223
      %v225 = vmul.f32 %v217, %v224
      %v226 = vmul.f32 %v218, %v224
      %v227 = vsel %vm134, %v225, 0.0
      %228 = vadd.xlane.f32.xlu0 %v227
      %v229 = vpop.xlane.xlu0 %228
      %v230 = vsel %vm134, %v226, 0.0
      %231 = vadd.xlane.f32.xlu0 %v230
      %v232 = vpop.xlane.xlu0 %231
      %v235 = vlaneseq
      %v236 = vand.u32 %v235, 127
      %v237 = vlaneseq
      %v238 = vshrl.u32 %v237, 7
      %v239 = vsub.s32 %v236, %v238
      %v240 = vrot.slane %v229, %v239
      %v241 = vlaneseq
      %v242 = vshrl.u32 %v241, 7
      %v243 = vsub.s32 %v236, %v242
      %v244 = vrot.slane %v232, %v243
      %vm245 = vcmask 1041409
      %v246 = vsel %vm245, %v244, %v240
      %vm248 = vcmask 58368
      %v249 = vsel %vm248, %v246, -inf
      %250 = vmax.xlane.f32.xlu0 %v249
      %v251 = vpop.xlane.xlu0 %250
      %v253 = vlaneseq
      %v254 = vshrl.u32 %v253, 7
      %v255 = vsub.s32 0, %v254
      %v256 = vrot.slane %v251, %v255
      %v257 = vlaneseq
      %v258 = vshrl.u32 %v257, 7
      %v259 = vsub.s32 1, %v258
      %v260 = vrot.slane %v251, %v259
      %v263 = vsub.f32 %v229, %v256
      %v264 = vsub.f32 %v232, %v260
      %v265 = vmul.f32 %v263, 1.442695
      %v266 = vpow.pop %v265
      %v267 = vmul.f32 %v264, 1.442695
      %v268 = vpow.pop %v267
      %271 = vset.pattern.permute.xlu0 0
      %272 = vperm.xlu0 %271, %v266
      %v273 = vpop.permute.xlu0 %272
      %274 = vset.pattern.permute.xlu0 0
      %275 = vperm.xlu0 %274, %v268
      %v276 = vpop.permute.xlu0 %275
      %v277 = vlaneseq
      %v278 = vshrl.u32 %v277, 7
      %v279 = vsub.s32 %v236, %v278
      %v280 = vrot.slane %v273, %v279
      %v281 = vlaneseq
      %v282 = vshrl.u32 %v281, 7
      %v283 = vsub.s32 %v236, %v282
      %v284 = vrot.slane %v276, %v283
      %v285 = vsel %vm245, %v284, %v280
      %v287 = vsel %vm248, %v285, 0.0
      %288 = vadd.xlane.f32.xlu0 %v287
      %v289 = vpop.xlane.xlu0 %288
      %v290 = vrcp.pop %v289
      %v292 = vlaneseq
      %v293 = vshrl.u32 %v292, 7
      %v294 = vsub.s32 0, %v293
      %v295 = vrot.slane %v290, %v294
      %v296 = vlaneseq
      %v297 = vshrl.u32 %v296, 7
      %v298 = vsub.s32 1, %v297
      %v299 = vrot.slane %v290, %v298
      %v302 = vmul.f32 %v266, %v295
      %v303 = vmul.f32 %v268, %v299
      %v304 = vld [vmem:[#allocation9] sm:$0xf]
      %v305 = vld [vmem:[#allocation9 + $0x4] sm:$0xf]
      %v306 = vunpack.c.l.bf16 %v304
      %v307 = vunpack.c.l.bf16 %v305
      %309 = vset.pattern.permute.xlu0 0
      %310 = vperm.xlu0 %309, %v302
      %v311 = vpop.permute.xlu0 %310
      %314 = vset.pattern.permute.xlu0 0
      %315 = vperm.xlu0 %314, %v303
      %v316 = vpop.permute.xlu0 %315
      %v318 = vmul.f32 %v311, %v306
      %v319 = vmul.f32 %v316, %v307
      %v320 = vsel %vm134, %v318, 0.0
      %v321 = vrot.slane %v320, 4
      %v322 = vadd.f32 %v320, %v321
      %v323 = vrot.slane %v322, 2
      %v324 = vadd.f32 %v322, %v323
      %v325 = vrot.slane %v324, 1
      %v326 = vadd.f32 %v324, %v325
      %v327 = vsel %vm134, %v319, 0.0
      %v328 = vrot.slane %v327, 4
      %v329 = vadd.f32 %v327, %v328
      %v330 = vrot.slane %v329, 2
      %v331 = vadd.f32 %v329, %v330
      %v332 = vrot.slane %v331, 1
      %v333 = vadd.f32 %v331, %v332
      %v334 = vpack.c.bf16 %v326, %v326
      %v335 = vpack.c.bf16 %v333, %v333
      %v336 = vld [vmem:[%s6] sm:$0xf]
      %v337 = vld [vmem:[%s6 + $0x4] sm:$0xf]
      %v338 = vld [vmem:[%s6 + $0x8] sm:$0xf]
      %v339 = vld [vmem:[%s6 + $0xc] sm:$0xf]
      %v340 = vld [vmem:[#allocation12] sm:$0xf]
      %v341 = vld [vmem:[#allocation12 + $0x4] sm:$0xf]
      %v342 = vld [vmem:[#allocation12 + $0x8] sm:$0xf]
      %v343 = vld [vmem:[#allocation12 + $0xc] sm:$0xf]
      %v348 = vunpack.c.l.b16 %v340
      %v349 = vunpack.c.l.b16 %v341
      %v350 = vunpack.c.l.b16 %v342
      %v351 = vunpack.c.l.b16 %v343
      %v352 = vpack.c.b16 %v349, %v348
      %v353 = vpack.c.b16 %v351, %v350
      %356 = vmatprep.subr.bf16.mxu0 0
      %357 = vmatpush1.bf16.msra.mxu0 %v352
      %358 = vmatprep.subr.bf16.mxu0 0
      %359 = vmatpush1.bf16.msra.mxu0 %v353
      %360 = vmatprep.subr.bf16.mxu0 0
      %361 = vmatpush1.bf16.msra.mxu0 0
      %362 = vmatprep.subr.bf16.mxu0 0
      %363 = vmatpush1.bf16.msra.mxu0 0
      %364 = vmatprep.subr.bf16.mxu0 0
      %365 = vmatpush1.bf16.msra.mxu0 0
      %366 = vmatprep.subr.bf16.mxu0 0
      %367 = vmatpush1.bf16.msra.mxu0 0
      %368 = vmatprep.subr.bf16.mxu0 0
      %369 = vmatpush1.bf16.msra.mxu0 0
      %370 = vmatprep.subr.bf16.mxu0 0
      %371 = vmatpush1.bf16.msra.mxu0 0
      %372 = vmatprep.subr.bf16.mxu0 0
      %373 = vmatpush1.bf16.msra.mxu0 0
      %374 = vmatprep.subr.bf16.mxu0 0
      %375 = vmatpush1.bf16.msra.mxu0 0
      %376 = vmatprep.subr.bf16.mxu0 0
      %377 = vmatpush1.bf16.msra.mxu0 0
      %378 = vmatprep.subr.bf16.mxu0 0
      %379 = vmatpush1.bf16.msra.mxu0 0
      %380 = vmatprep.subr.bf16.mxu0 0
      %381 = vmatpush1.bf16.msra.mxu0 0
      %382 = vmatprep.subr.bf16.mxu0 0
      %383 = vmatpush1.bf16.msra.mxu0 0
      %384 = vmatprep.subr.bf16.mxu0 0
      %385 = vmatpush1.bf16.msra.mxu0 0
      %386 = vmatprep.subr.bf16.mxu0 0
      %387 = vmatpush1.bf16.msra.mxu0 0
      %388 = vmatprep.mubr.bf16.mxu0 0
      %389 = vmatmul.mubr.bf16.gmra.mrb[0].mxu0 %v136
      %v390 = vpop.f32.mrb[0].mxu0
      %v391 = vadd.f32 0.0, %v390
      %v392 = vpop.f32.mrb[0].mxu0
      %v393 = vpop.f32.mrb[0].mxu0
      %v394 = vpop.f32.mrb[0].mxu0
      %395 = vdwg.mxu0
      %v398 = vunpack.c.l.b16 %v334
      %v399 = vunpack.c.l.b16 %v335
      %v400 = vsel %vm245, %v399, %v398
      %v401 = vpack.c.b16 %v400, %v400
      %v406 = vunpack.c.l.b16 %v336
      %v407 = vunpack.c.l.b16 %v337
      %v408 = vunpack.c.l.b16 %v338
      %v409 = vunpack.c.l.b16 %v339
      %v410 = vpack.c.b16 %v407, %v406
      %v411 = vpack.c.b16 %v409, %v408
      %v415 = vsel %vm134, %v401, 0
      %417 = vmatprep.subr.bf16.mxu0 0
      %418 = vmatpush1.bf16.msra.mxu0 %v410
      %419 = vmatprep.subr.bf16.mxu0 0
      %420 = vmatpush1.bf16.msra.mxu0 %v411
      %421 = vmatprep.subr.bf16.mxu0 0
      %422 = vmatpush1.bf16.msra.mxu0 0
      %423 = vmatprep.subr.bf16.mxu0 0
      %424 = vmatpush1.bf16.msra.mxu0 0
      %425 = vmatprep.subr.bf16.mxu0 0
      %426 = vmatpush1.bf16.msra.mxu0 0
      %427 = vmatprep.subr.bf16.mxu0 0
      %428 = vmatpush1.bf16.msra.mxu0 0
      %429 = vmatprep.subr.bf16.mxu0 0
      %430 = vmatpush1.bf16.msra.mxu0 0
      %431 = vmatprep.subr.bf16.mxu0 0
      %432 = vmatpush1.bf16.msra.mxu0 0
      %433 = vmatprep.subr.bf16.mxu0 0
      %434 = vmatpush1.bf16.msra.mxu0 0
      %435 = vmatprep.subr.bf16.mxu0 0
      %436 = vmatpush1.bf16.msra.mxu0 0
      %437 = vmatprep.subr.bf16.mxu0 0
      %438 = vmatpush1.bf16.msra.mxu0 0
      %439 = vmatprep.subr.bf16.mxu0 0
      %440 = vmatpush1.bf16.msra.mxu0 0
      %441 = vmatprep.subr.bf16.mxu0 0
      %442 = vmatpush1.bf16.msra.mxu0 0
      %443 = vmatprep.subr.bf16.mxu0 0
      %444 = vmatpush1.bf16.msra.mxu0 0
      %445 = vmatprep.subr.bf16.mxu0 0
      %446 = vmatpush1.bf16.msra.mxu0 0
      %447 = vmatprep.subr.bf16.mxu0 0
      %448 = vmatpush1.bf16.msra.mxu0 0
      %449 = vmatprep.mubr.bf16.mxu0 0
      %450 = vmatmul.mubr.bf16.gmra.mrb[0].mxu0 %v415
      %v451 = vpop.f32.mrb[0].mxu0
      %v452 = vadd.f32 %v391, %v451
      %v453 = vpop.f32.mrb[0].mxu0
      %v454 = vpop.f32.mrb[0].mxu0
      %v455 = vpop.f32.mrb[0].mxu0
      %456 = vdwg.mxu0
      %s457 = scalar_lea.vmem [#allocation4], %s103
      %v458 = vld [vmem:[%s457] sm:$0x1]
      %v459 = vunpack.c.l.bf16 %v458
      %v460 = vadd.f32 %v452, %v459
      %v461 = vxor.u32 %v460, 2147483648
      %v462 = vmul.f32 %v461, 1.442695
      %v463 = vpow.pop %v462
      %v464 = vadd.f32 %v463, 1.0
      %v465 = vrcp.pop %v464
      %v466 = vmul.f32 1.0, %v465
      %v467 = vtanh.pop %v460
      %469 = vrot.lane.b32.xlu0 %v109, 32
      %v470 = vpop.permute.xlu0 %469
      %v472 = vmul.f32 %v466, %v470
      %474 = vrot.lane.b32.xlu0 %v467, 64
      %v475 = vpop.permute.xlu0 %474
      %v477 = vmul.f32 %v466, %v475
      %479 = vrot.lane.b32.xlu0 %v477, 32
      %v480 = vpop.permute.xlu0 %479
      %v482 = vadd.f32 %v472, %v480
      %v483 = vtanh.pop %v482
      %485 = vrot.lane.b32.xlu0 %v483, 64
      %v486 = vpop.permute.xlu0 %485
      %v488 = vmul.f32 %v466, %v486
      %490 = vrot.lane.b32.xlu0 %v488, 32
      %v491 = vpop.permute.xlu0 %490
      %493 = vst.msk [vmem:[#allocation2] sm:$0x3] %vm99, %v491
      %495 = vrot.lane.b32.xlu0 %v482, 96
      %v496 = vpop.permute.xlu0 %495
      %498 = vst.msk [vmem:[#allocation3] sm:$0x3] %vm99, %v496
      %s499 = smul.u32 %s103, 2
      %s500 = scalar_lea.vmem [#allocation13], %s499
      %501 = vst.msk [vmem:[%s500] sm:$0x3] %vm99, %v491
    $region58: #{tpu_custom_call.1} parent=1 // loop_footer
      %s107 = sadd.s32 1, %s103
    $region59: #{tpu_custom_call.1} parent=1 // loop_footer_branch
      %102 = sbr.rel target = $region55
    $region60: #{tpu_custom_call.1} parent=1 // loop_exit
      _
    // Predicated region
    $region61: #{tpu_custom_call.1} parent=1 // pred_check
      _
    $region62: #{tpu_custom_call.1} parent=1 // pred_check_branch
      %503 = sbr.rel (0) target = $region64
    $region63: #{tpu_custom_call.1} parent=1 // pred_region
      %s505 = ssub.s32 256, 256
      %506 = vsyncadd [#allocation6], %s505
      %s507 = sshll.u32 [#allocation13], 4
      %s508 = int_to_ptr.vmem [resolvable:$true] %s507
      %513 = dma.vmem_to_hbm [thread:$0]  %s508, 256, %s8, [#allocation6], 32, 32, 2
    $region64: #{tpu_custom_call.1} parent=1 // pred_fallthru
      _
    // Predicated region
    $region65: #{tpu_custom_call.1} parent=1 // pred_check
      _
    $region66: #{tpu_custom_call.1} parent=1 // pred_check_branch
      %515 = sbr.rel (0) target = $region68
    $region67: #{tpu_custom_call.1} parent=1 // pred_region
      %516 = dma.done [#allocation6], 256
    $region68: #{tpu_custom_call.1} parent=1 // pred_fallthru
      _
    %517 = vsyncpa [#allocation5], 1
    %518 = vsyncpa [#allocation8], 1
    %519 = vsyncpa [#allocation11], 1
    %520 = vsyncpa [#allocation6], 1

</llo_original>
